<compile_context>
chip_gen: v6e
topology: v6e:2x2x1
jax: 0.10.0
libtpu: 0.0.40
codegen_flags: <defaults>
</compile_context>

<pallas_src>
import functools

import jax
import jax.numpy as jnp
from jax import lax
from jax.experimental import pallas as pl
from jax.experimental.pallas import tpu as pltpu


def _round_up(x: int, m: int) -> int:
    return ((x + m - 1) // m) * m


def _masked_linear_kernel(x_ref, w_ref, m_ref, b_ref, o_ref, acc_ref, *,
                          mask_is_binary):
    """One (tm, tn) output tile; grid = (M_tiles, N_tiles, K_tiles), K last."""
    k = pl.program_id(2)

    @pl.when(k == 0)
    def _():
        acc_ref[...] = jnp.zeros_like(acc_ref)

    w = w_ref[...]                                        # (tn, tk) bf16
    if mask_is_binary:
        # int8 0/1 mask: compare + select (no bf16 multiply, no extra casts).
        w_t = jnp.where(m_ref[...] != 0, w, jnp.zeros_like(w))
    else:
        # Arbitrary-valued mask: exact f32 multiply, then narrow for the MXU.
        w_t = (w.astype(jnp.float32) * m_ref[...]).astype(w.dtype)

    # Contract x's K dim (1) against masked-weight's K dim (1): (tm, tn).
    # No .T -> no XLU transpose; MXU consumes it natively, accumulates in f32.
    acc_ref[...] += lax.dot_general(
        x_ref[...], w_t,
        dimension_numbers=(((1,), (1,)), ((), ())),
        preferred_element_type=jnp.float32,
    )

    @pl.when(k == pl.num_programs(2) - 1)
    def _():
        # Bias added exactly once, after the K reduction is complete.
        o_ref[...] = (acc_ref[...] + b_ref[...]).astype(o_ref.dtype)


def masked_linear(x, weight, mask, bias, *, tm=1024, tn=256, tk=2048,
                  binary_mask=True, compute_dtype=jnp.bfloat16):
    """x: (B, in_f), weight/mask: (out_f, in_f), bias: (out_f,) -> (B, out_f).

    Contract: MXU inputs are bfloat16 (f32 accumulation); with
    `binary_mask=True` the mask must contain only 0/1 values (it streams as
    int8).  Set `binary_mask=False` for arbitrary-valued masks (streams f32).
    """
    B, in_f = x.shape
    out_f, in_f_w = weight.shape
    assert in_f_w == in_f and mask.shape == weight.shape and bias.shape == (out_f,)

    out_dtype = x.dtype  # keep the caller's dtype for the output

    # Pre-cast the HBM streams (halves the dominant weight/x traffic vs f32).
    x = x.astype(compute_dtype)
    weight = weight.astype(compute_dtype)
    if binary_mask:
        mask_s = (mask != 0).astype(jnp.int8)   # 1 B/elem, exact for 0/1 masks
    else:
        mask_s = mask.astype(jnp.float32)       # exact for non-binary masks
    bias = bias.astype(jnp.float32)

    # Clamp tiles to the (aligned) problem: batch tile multiple of 16 (bf16
    # sublane packing), feature tiles multiples of 128 (lane-dense / MXU / the
    # int8 mask's (32,128) tiling).  tm large enough that typical batches
    # collapse to a single M tile -> weights/mask are read from HBM once.
    tm = min(tm, _round_up(B, 16))
    tn = min(tn, _round_up(out_f, 128))
    tk = min(tk, _round_up(in_f, 128))

    Mp = _round_up(B, tm)
    Np = _round_up(out_f, tn)
    Kp = _round_up(in_f, tk)

    # v7x megacore: make sure the "parallel" (M, N) grid has >= 2 blocks when
    # the layer is big enough, so both TensorCores get work.  Halving tn keeps
    # it a multiple of 128 and keeps Np a multiple of tn.
    if Mp // tm == 1 and Np // tn == 1 and tn % 256 == 0:
        tn //= 2

    # Zero-pad to tile multiples (zeros contribute nothing to the matmul,
    # padded output rows/cols are sliced off below).
    x_p = jnp.pad(x, ((0, Mp - B), (0, Kp - in_f)))
    w_p = jnp.pad(weight, ((0, Np - out_f), (0, Kp - in_f)))
    m_p = jnp.pad(mask_s, ((0, Np - out_f), (0, Kp - in_f)))
    b_p = jnp.pad(bias, (0, Np - out_f)).reshape(1, Np)

    grid = (Mp // tm, Np // tn, Kp // tk)

    out_p = pl.pallas_call(
        functools.partial(_masked_linear_kernel, mask_is_binary=binary_mask),
        out_shape=jax.ShapeDtypeStruct((Mp, Np), out_dtype),
        grid_spec=pltpu.PrefetchScalarGridSpec(
            num_scalar_prefetch=0,
            grid=grid,
            in_specs=[
                pl.BlockSpec((tm, tk), lambda i, j, k: (i, k)),   # x (bf16)
                pl.BlockSpec((tn, tk), lambda i, j, k: (j, k)),   # weight (bf16)
                pl.BlockSpec((tn, tk), lambda i, j, k: (j, k)),   # mask (int8/f32)
                pl.BlockSpec((1, tn), lambda i, j, k: (0, j)),    # bias (f32)
            ],
            out_specs=pl.BlockSpec((tm, tn), lambda i, j, k: (i, j)),
            scratch_shapes=[pltpu.VMEM((tm, tn), jnp.float32)],   # f32 accumulator
        ),
        compiler_params=pltpu.CompilerParams(
            dimension_semantics=("parallel", "parallel", "arbitrary"),
            # 48 MiB: plenty for the double-buffered bf16/int8 tiles, and safe
            # on v7x (64 MiB VMEM per TC) as well as v5e/v6e (128 MiB).
            vmem_limit_bytes=48 * 1024 * 1024,
        ),
    )(x_p, w_p, m_p, b_p)

    return out_p[:B, :out_f]


if __name__ == "__main__":
    # Small shapes consistent with the module: batch=8, in_features=32, out_features=16
    B, in_features, out_features = 8, 32, 16

    key = jax.random.PRNGKey(0)
    kx, kw, kb = jax.random.split(key, 3)

    # Deterministic "reset_parameters"-style init: uniform(-stdv, stdv)
    stdv = 1.0 / (in_features ** 0.5)
    x = jax.random.normal(kx, (B, in_features), dtype=jnp.float32)
    weight = jax.random.uniform(kw, (out_features, in_features),
                                minval=-stdv, maxval=stdv, dtype=jnp.float32)
    bias = jax.random.uniform(kb, (out_features,),
                              minval=-stdv, maxval=stdv, dtype=jnp.float32)

    # Mask starts as all-ones; emulate a prune() by zeroing small-magnitude weights.
    # TODO(synk): prune()/reset_parameters() are host-side parameter mutations,
    # not part of the forward pass; only the masked forward is a kernel.
    threshold = 0.5 * stdv
    mask = jnp.where(jnp.abs(weight) < threshold, 0.0, 1.0).astype(jnp.float32)

    # --- Binary-mask fast path (int8 mask stream + select) ---
    out = masked_linear(x, weight, mask, bias)
    out = jax.block_until_ready(out)

    # Reference 1: same bf16 MXU inputs + f32 accumulation (tight tolerance).
    ref_bf16 = lax.dot_general(
        x.astype(jnp.bfloat16), (weight * mask).astype(jnp.bfloat16),
        dimension_numbers=(((1,), (1,)), ((), ())),
        preferred_element_type=jnp.float32) + bias
    assert jnp.allclose(out, ref_bf16, atol=1e-4, rtol=1e-4), \
        "mismatch vs bf16-matched reference (binary mask path)"

    # Reference 2: full-f32 math (loose tolerance, bf16 MXU inputs).
    ref_f32 = x @ (weight * mask).T + bias
    assert jnp.allclose(out, ref_f32, atol=5e-2, rtol=5e-2), \
        "mismatch vs f32 reference (binary mask path)"

    # --- Non-binary mask fallback (f32 mask stream + multiply) ---
    mask_frac = mask * 0.5  # values in {0, 0.5}: not representable as 0/1 int8
    out_nb = masked_linear(x, weight, mask_frac, bias, binary_mask=False)
    out_nb = jax.block_until_ready(out_nb)

    ref_nb = lax.dot_general(
        x.astype(jnp.bfloat16),
        (weight.astype(jnp.bfloat16).astype(jnp.float32) * mask_frac
         ).astype(jnp.bfloat16),
        dimension_numbers=(((1,), (1,)), ((), ())),
        preferred_element_type=jnp.float32) + bias
    assert jnp.allclose(out_nb, ref_nb, atol=1e-4, rtol=1e-4), \
        "mismatch vs matched reference (non-binary mask path)"
    assert jnp.allclose(out_nb, x @ (weight * mask_frac).T + bias,
                        atol=5e-2, rtol=5e-2), \
        "mismatch vs f32 reference (non-binary mask path)"

    print("KERNEL_OK")
</pallas_src>

<mosaic_0001>
module attributes {stable_mosaic.version = 11 : i64} {
  func.func @_masked_linear_kernel(%arg0: i32, %arg1: i32, %arg2: i32, %arg3: memref<16x128xbf16, #tpu.memory_space<vmem>>, %arg4: memref<128x128xbf16, #tpu.memory_space<vmem>>, %arg5: memref<128x128xi8, #tpu.memory_space<vmem>>, %arg6: memref<1x128xf32, #tpu.memory_space<vmem>>, %arg7: memref<16x128xf32, #tpu.memory_space<vmem>>, %arg8: memref<16x128xf32, #tpu.memory_space<vmem>>) attributes {dimension_semantics = [#tpu.dimension_semantics<parallel>, #tpu.dimension_semantics<parallel>, #tpu.dimension_semantics<arbitrary>], iteration_bounds = array<i64: 1, 1, 1>, scalar_prefetch = 0 : i64, scratch_operands = 1 : i64, tpu.core_type = #tpu.core_type<tc>, window_params = [{transform_indices = @transform_0, window_bounds = array<i64: 16, 128>}, {transform_indices = @transform_1, window_bounds = array<i64: 128, 128>}, {transform_indices = @transform_2, window_bounds = array<i64: 128, 128>}, {transform_indices = @transform_3, window_bounds = array<i64: 1, 128>}, {transform_indices = @transform_4, window_bounds = array<i64: 16, 128>}]} {
    %c0_i32 = arith.constant 0 : i32
    %0 = arith.cmpi eq, %arg2, %c0_i32 : i32
    %1 = arith.extui %0 : i1 to i32
    %c0_i32_0 = arith.constant 0 : i32
    %2 = arith.cmpi ne, %1, %c0_i32_0 : i32
    scf.if %2 {
      %cst_13 = arith.constant 0.000000e+00 : f32
      %17 = vector.broadcast %cst_13 : f32 to vector<16x128xf32>
      %c0_14 = arith.constant 0 : index
      %c0_15 = arith.constant 0 : index
      %18 = vector.load %arg8[%c0_14, %c0_15] : memref<16x128xf32, #tpu.memory_space<vmem>>, vector<16x128xf32>
      tpu.vector_store %arg8[%c0_14, %c0_15], %17 {strides = array<i32>} : memref<16x128xf32, #tpu.memory_space<vmem>>, vector<16x128xf32>,
    } else {
    }
    %c0 = arith.constant 0 : index
    %c0_1 = arith.constant 0 : index
    %3 = vector.load %arg4[%c0, %c0_1] : memref<128x128xbf16, #tpu.memory_space<vmem>>, vector<128x128xbf16>
    %c0_2 = arith.constant 0 : index
    %c0_3 = arith.constant 0 : index
    %4 = vector.load %arg5[%c0_2, %c0_3] : memref<128x128xi8, #tpu.memory_space<vmem>>, vector<128x128xi8>
    %c0_i8 = arith.constant 0 : i8
    %5 = vector.broadcast %c0_i8 : i8 to vector<128x128xi8>
    %6 = arith.cmpi ne, %4, %5 : vector<128x128xi8>
    %cst = arith.constant 0.000000e+00 : bf16
    %7 = vector.broadcast %cst : bf16 to vector<128x128xbf16>
    %8 = arith.select %6, %3, %7 : vector<128x128xi1>, vector<128x128xbf16>
    %c0_4 = arith.constant 0 : index
    %c0_5 = arith.constant 0 : index
    %9 = vector.load %arg8[%c0_4, %c0_5] : memref<16x128xf32, #tpu.memory_space<vmem>>, vector<16x128xf32>
    %c0_6 = arith.constant 0 : index
    %c0_7 = arith.constant 0 : index
    %10 = vector.load %arg3[%c0_6, %c0_7] : memref<16x128xbf16, #tpu.memory_space<vmem>>, vector<16x128xbf16>
    %cst_8 = arith.constant dense<0.000000e+00> : vector<16x128xf32>
    %11 = tpu.matmul %10, %8, %cst_8 {dimension_numbers = #tpu.dot_dimension_numbers<[1], [1], [0], [0], [0, 0, 1, 0], [], []>} : vector<16x128xbf16>, vector<128x128xbf16>, vector<16x128xf32> -> vector<16x128xf32>
    %12 = arith.addf %9, %11 : vector<16x128xf32>
    %c0_9 = arith.constant 0 : index
    %c0_10 = arith.constant 0 : index
    %13 = vector.load %arg8[%c0_9, %c0_10] : memref<16x128xf32, #tpu.memory_space<vmem>>, vector<16x128xf32>
    tpu.vector_store %arg8[%c0_9, %c0_10], %12 {strides = array<i32>} : memref<16x128xf32, #tpu.memory_space<vmem>>, vector<16x128xf32>,
    %c0_i32_11 = arith.constant 0 : i32
    %14 = arith.cmpi eq, %arg2, %c0_i32_11 : i32
    %15 = arith.extui %14 : i1 to i32
    %c0_i32_12 = arith.constant 0 : i32
    %16 = arith.cmpi ne, %15, %c0_i32_12 : i32
    scf.if %16 {
      %c0_13 = arith.constant 0 : index
      %c0_14 = arith.constant 0 : index
      %17 = vector.load %arg8[%c0_13, %c0_14] : memref<16x128xf32, #tpu.memory_space<vmem>>, vector<16x128xf32>
      %c0_15 = arith.constant 0 : index
      %c0_16 = arith.constant 0 : index
      %18 = vector.load %arg6[%c0_15, %c0_16] : memref<1x128xf32, #tpu.memory_space<vmem>>, vector<1x128xf32>
      %19 = vector.broadcast %18 : vector<1x128xf32> to vector<16x128xf32>
      %20 = arith.addf %17, %19 : vector<16x128xf32>
      %c0_17 = arith.constant 0 : index
      %c0_18 = arith.constant 0 : index
      %21 = vector.load %arg7[%c0_17, %c0_18] : memref<16x128xf32, #tpu.memory_space<vmem>>, vector<16x128xf32>
      tpu.vector_store %arg7[%c0_17, %c0_18], %20 {strides = array<i32>} : memref<16x128xf32, #tpu.memory_space<vmem>>, vector<16x128xf32>,
    } else {
    }
    return
  }
  func.func @transform_0(%arg0: i32, %arg1: i32, %arg2: i32) -> (i32, i32) {
    %c0_i32 = arith.constant 0 : i32
    return %arg0, %arg2 : i32, i32
  }
  func.func @transform_1(%arg0: i32, %arg1: i32, %arg2: i32) -> (i32, i32) {
    %c0_i32 = arith.constant 0 : i32
    return %arg1, %arg2 : i32, i32
  }
  func.func @transform_2(%arg0: i32, %arg1: i32, %arg2: i32) -> (i32, i32) {
    %c0_i32 = arith.constant 0 : i32
    return %arg1, %arg2 : i32, i32
  }
  func.func @transform_3(%arg0: i32, %arg1: i32, %arg2: i32) -> (i32, i32) {
    %c0_i32 = arith.constant 0 : i32
    %c0_i32_0 = arith.constant 0 : i32
    return %c0_i32, %arg1 : i32, i32
  }
  func.func @transform_4(%arg0: i32, %arg1: i32, %arg2: i32) -> (i32, i32) {
    %c0_i32 = arith.constant 0 : i32
    return %arg0, %arg1 : i32, i32
  }
}

</mosaic_0001>

<llo_original>
// kernel: tpu_custom_call.1
$region0: #{tpu_custom_call.1}
  #allocation0 [shape = 'u32[]', space=smem, size = 0x4, offset = 0x4, fixed_abs, tag = 'smem constant byte address 0x4 - core index']
  #allocation1 [shape = 'u32[144,128]{1,0:T(1,128)}', space=vmem, size = 0x12000, scoped, tag = 'internal scratch']
  #allocation2 [shape = 'f32[16,128]{1,0:T(8,128)}', space=vmem, size = 0x2000, scoped, tag = 'scratch operand']
  %s0 = inlined_call_operand.hbm [shape: bf16[16,128], index: 0, kind: input, shape index: {}]
  %s1 = inlined_call_operand.hbm [shape: bf16[128,128], index: 1, kind: input, shape index: {}]
  %s2 = inlined_call_operand.hbm [shape: s8[128,128], index: 2, kind: input, shape index: {}]
  %s3 = inlined_call_operand.vmem [shape: f32[1,128], index: 3, kind: input, shape index: {}]
  %s4 = inlined_call_operand.hbm [shape: f32[16,128], index: 4, kind: output, shape index: {}]
  %s5 = sld [smem:[#allocation0]]
  $region46: #{tpu_custom_call.1} parent=0
    _
  %s7 = ssub.s32 1, %s5
  %s8 = scalar_select 0, %s7, %s5
  $region1: #{tpu_custom_call.1} parent=0
    #allocation3 [shape = 'u8[4096]{0}', space=vmem, size = 0x1000, scoped, tag = 'input window, operand 0, single buffered']
    #allocation4 [shape = 's32[1]{0}', space=sflag, size = 0x4, scoped, tag = 'scoped memory for tpu_custom_call.1']
    #allocation5 [shape = 's32[1]{0}', space=sflag, size = 0x4, scoped, tag = 'scoped memory for tpu_custom_call.1']
    #allocation6 [shape = 'u8[32768]{0}', space=vmem, size = 0x8000, scoped, tag = 'input window, operand 1, single buffered']
    #allocation7 [shape = 's32[1]{0}', space=sflag, size = 0x4, scoped, tag = 'scoped memory for tpu_custom_call.1']
    #allocation8 [shape = 'u8[16384]{0}', space=vmem, size = 0x4000, scoped, tag = 'input window, operand 2, single buffered']
    #allocation9 [shape = 'u8[8192]{0}', space=vmem, size = 0x2000, scoped, tag = 'output window, operand 0, single buffered']
    %9 = vsyncpa [#allocation4], 0
    %10 = vsyncpa [#allocation7], 0
    %11 = vsyncpa [#allocation5], 0
    // Predicated region
    $region2: #{tpu_custom_call.1} parent=1 // pred_check
      _
    $region3: #{tpu_custom_call.1} parent=1 // pred_check_branch
      %13 = sbr.rel (0) target = $region5
    $region4: #{tpu_custom_call.1} parent=1 // pred_region
      %s15 = ssub.s32 128, 128
      %16 = vsyncadd [#allocation4], %s15
      %s17 = sshll.u32 [#allocation3], 4
      %s18 = int_to_ptr.vmem [resolvable:$true] %s17
      %23 = dma.hbm_to_vmem [thread:$0]  %s0, 128, %s18, [#allocation4], 64, 64, 4
    $region5: #{tpu_custom_call.1} parent=1 // pred_fallthru
      _
    // Predicated region
    $region6: #{tpu_custom_call.1} parent=1 // pred_check
      _
    $region7: #{tpu_custom_call.1} parent=1 // pred_check_branch
      %25 = sbr.rel (0) target = $region9
    $region8: #{tpu_custom_call.1} parent=1 // pred_region
      %s27 = ssub.s32 1024, 1024
      %28 = vsyncadd [#allocation7], %s27
      %s29 = sshll.u32 [#allocation6], 4
      %s30 = int_to_ptr.vmem [resolvable:$true] %s29
      %35 = dma.hbm_to_vmem [thread:$0]  %s1, 1024, %s30, [#allocation7], 64, 64, 4
    $region9: #{tpu_custom_call.1} parent=1 // pred_fallthru
      _
    // Predicated region
    $region10: #{tpu_custom_call.1} parent=1 // pred_check
      _
    $region11: #{tpu_custom_call.1} parent=1 // pred_check_branch
      %37 = sbr.rel (0) target = $region13
    $region12: #{tpu_custom_call.1} parent=1 // pred_region
      %s39 = ssub.s32 512, 512
      %40 = vsyncadd [#allocation7], %s39
      %s41 = sshll.u32 [#allocation8], 4
      %s42 = int_to_ptr.vmem [resolvable:$true] %s41
      %47 = dma.hbm_to_vmem [thread:$0]  %s2, 512, %s42, [#allocation7], 128, 128, 8
    $region13: #{tpu_custom_call.1} parent=1 // pred_fallthru
      _
    // Predicated region
    $region14: #{tpu_custom_call.1} parent=1 // pred_check
      _
    $region15: #{tpu_custom_call.1} parent=1 // pred_check_branch
      %49 = sbr.rel (0) target = $region17
    $region16: #{tpu_custom_call.1} parent=1 // pred_region
      _
    $region17: #{tpu_custom_call.1} parent=1 // pred_fallthru
      _
    // Predicated region
    $region18: #{tpu_custom_call.1} parent=1 // pred_check
      _
    $region19: #{tpu_custom_call.1} parent=1 // pred_check_branch
      %51 = sbr.rel (0) target = $region21
    $region20: #{tpu_custom_call.1} parent=1 // pred_region
      %52 = dma.done [#allocation4], 128
    $region21: #{tpu_custom_call.1} parent=1 // pred_fallthru
      _
    // Predicated region
    $region22: #{tpu_custom_call.1} parent=1 // pred_check
      _
    $region23: #{tpu_custom_call.1} parent=1 // pred_check_branch
      %54 = sbr.rel (0) target = $region25
    $region24: #{tpu_custom_call.1} parent=1 // pred_region
      %55 = dma.done [#allocation7], 1024
    $region25: #{tpu_custom_call.1} parent=1 // pred_fallthru
      _
    // Predicated region
    $region26: #{tpu_custom_call.1} parent=1 // pred_check
      _
    $region27: #{tpu_custom_call.1} parent=1 // pred_check_branch
      %57 = sbr.rel (0) target = $region29
    $region28: #{tpu_custom_call.1} parent=1 // pred_region
      %58 = dma.done [#allocation7], 512
    $region29: #{tpu_custom_call.1} parent=1 // pred_fallthru
      _
    %p63 = scmp.eq.s32.totalorder 0, 0
    // Predicated region
    $region30: #{tpu_custom_call.1} parent=1 // pred_check
      %p64 = pneg %p63
    $region31: #{tpu_custom_call.1} parent=1 // pred_check_branch
      %66 = sbr.rel (%p64) target = $region33
    $region32: #{tpu_custom_call.1} parent=1 // pred_region
      %67 = vst [vmem:[#allocation2] sm:$0xff] 0.0
      %68 = vst [vmem:[#allocation2 + $0x8] sm:$0xff] 0.0
    $region33: #{tpu_custom_call.1} parent=1 // pred_fallthru
      _
    %v69 = vld [vmem:[#allocation6] sm:$0xf]
    %v70 = vld [vmem:[#allocation6 + $0x4] sm:$0xf]
    %v71 = vld [vmem:[#allocation6 + $0x8] sm:$0xf]
    %v72 = vld [vmem:[#allocation6 + $0xc] sm:$0xf]
    %v73 = vld [vmem:[#allocation6 + $0x10] sm:$0xf]
    %v74 = vld [vmem:[#allocation6 + $0x14] sm:$0xf]
    %v75 = vld [vmem:[#allocation6 + $0x18] sm:$0xf]
    %v76 = vld [vmem:[#allocation6 + $0x1c] sm:$0xf]
    %v77 = vld [vmem:[#allocation6 + $0x20] sm:$0xf]
    %v78 = vld [vmem:[#allocation6 + $0x24] sm:$0xf]
    %v79 = vld [vmem:[#allocation6 + $0x28] sm:$0xf]
    %v80 = vld [vmem:[#allocation6 + $0x2c] sm:$0xf]
    %v81 = vld [vmem:[#allocation6 + $0x30] sm:$0xf]
    %v82 = vld [vmem:[#allocation6 + $0x34] sm:$0xf]
    %v83 = vld [vmem:[#allocation6 + $0x38] sm:$0xf]
    %v84 = vld [vmem:[#allocation6 + $0x3c] sm:$0xf]
    %v85 = vld [vmem:[#allocation8] sm:$0xff]
    %v86 = vld [vmem:[#allocation8 + $0x8] sm:$0xff]
    %v87 = vld [vmem:[#allocation8 + $0x10] sm:$0xff]
    %v88 = vld [vmem:[#allocation8 + $0x18] sm:$0xff]
    %vm89 = vnez %v85
    %vm90 = vnez %v86
    %vm91 = vnez %v87
    %vm92 = vnez %v88
    %v93 = vsel %vm89, 16843009, 0
    %v94 = vsel %vm90, 16843009, 0
    %v95 = vsel %vm91, 16843009, 0
    %v96 = vsel %vm92, 16843009, 0
    %v97 = vunpack.c.0.s8 %v93
    %v98 = vunpack.c.1.s8 %v93
    %v99 = vunpack.c.2.s8 %v93
    %v100 = vunpack.c.3.s8 %v93
    %v101 = vunpack.c.0.s8 %v94
    %v102 = vunpack.c.1.s8 %v94
    %v103 = vunpack.c.2.s8 %v94
    %v104 = vunpack.c.3.s8 %v94
    %v105 = vunpack.c.0.s8 %v95
    %v106 = vunpack.c.1.s8 %v95
    %v107 = vunpack.c.2.s8 %v95
    %v108 = vunpack.c.3.s8 %v95
    %v109 = vunpack.c.0.s8 %v96
    %v110 = vunpack.c.1.s8 %v96
    %v111 = vunpack.c.2.s8 %v96
    %v112 = vunpack.c.3.s8 %v96
    %v113 = vpack.c.b16 %v97, %v97
    %v114 = vpack.c.b8 %v113, %v113
    %v115 = vpack.c.b16 %v98, %v98
    %v116 = vpack.c.b8 %v115, %v115
    %v117 = vpack.c.b16 %v99, %v99
    %v118 = vpack.c.b8 %v117, %v117
    %v119 = vpack.c.b16 %v100, %v100
    %v120 = vpack.c.b8 %v119, %v119
    %v121 = vpack.c.b16 %v101, %v101
    %v122 = vpack.c.b8 %v121, %v121
    %v123 = vpack.c.b16 %v102, %v102
    %v124 = vpack.c.b8 %v123, %v123
    %v125 = vpack.c.b16 %v103, %v103
    %v126 = vpack.c.b8 %v125, %v125
    %v127 = vpack.c.b16 %v104, %v104
    %v128 = vpack.c.b8 %v127, %v127
    %v129 = vpack.c.b16 %v105, %v105
    %v130 = vpack.c.b8 %v129, %v129
    %v131 = vpack.c.b16 %v106, %v106
    %v132 = vpack.c.b8 %v131, %v131
    %v133 = vpack.c.b16 %v107, %v107
    %v134 = vpack.c.b8 %v133, %v133
    %v135 = vpack.c.b16 %v108, %v108
    %v136 = vpack.c.b8 %v135, %v135
    %v137 = vpack.c.b16 %v109, %v109
    %v138 = vpack.c.b8 %v137, %v137
    %v139 = vpack.c.b16 %v110, %v110
    %v140 = vpack.c.b8 %v139, %v139
    %v141 = vpack.c.b16 %v111, %v111
    %v142 = vpack.c.b8 %v141, %v141
    %v143 = vpack.c.b16 %v112, %v112
    %v144 = vpack.c.b8 %v143, %v143
    %vm145 = vnez %v114
    %vm146 = vnez %v116
    %vm147 = vnez %v118
    %vm148 = vnez %v120
    %vm149 = vnez %v122
    %vm150 = vnez %v124
    %vm151 = vnez %v126
    %vm152 = vnez %v128
    %vm153 = vnez %v130
    %vm154 = vnez %v132
    %vm155 = vnez %v134
    %vm156 = vnez %v136
    %vm157 = vnez %v138
    %vm158 = vnez %v140
    %vm159 = vnez %v142
    %vm160 = vnez %v144
    %v161 = vsel %vm145, 16843009, 0
    %v162 = vsel %vm146, 16843009, 0
    %v163 = vsel %vm147, 16843009, 0
    %v164 = vsel %vm148, 16843009, 0
    %v165 = vsel %vm149, 16843009, 0
    %v166 = vsel %vm150, 16843009, 0
    %v167 = vsel %vm151, 16843009, 0
    %v168 = vsel %vm152, 16843009, 0
    %v169 = vsel %vm153, 16843009, 0
    %v170 = vsel %vm154, 16843009, 0
    %v171 = vsel %vm155, 16843009, 0
    %v172 = vsel %vm156, 16843009, 0
    %v173 = vsel %vm157, 16843009, 0
    %v174 = vsel %vm158, 16843009, 0
    %v175 = vsel %vm159, 16843009, 0
    %v176 = vsel %vm160, 16843009, 0
    %v177 = vunpack.c.1.s8 %v161
    %v178 = vunpack.c.0.s8 %v161
    %v179 = vpack.c.b16 %v177, %v178
    %v180 = vunpack.c.1.s8 %v162
    %v181 = vunpack.c.0.s8 %v162
    %v182 = vpack.c.b16 %v180, %v181
    %v183 = vunpack.c.1.s8 %v163
    %v184 = vunpack.c.0.s8 %v163
    %v185 = vpack.c.b16 %v183, %v184
    %v186 = vunpack.c.1.s8 %v164
    %v187 = vunpack.c.0.s8 %v164
    %v188 = vpack.c.b16 %v186, %v187
    %v189 = vunpack.c.1.s8 %v165
    %v190 = vunpack.c.0.s8 %v165
    %v191 = vpack.c.b16 %v189, %v190
    %v192 = vunpack.c.1.s8 %v166
    %v193 = vunpack.c.0.s8 %v166
    %v194 = vpack.c.b16 %v192, %v193
    %v195 = vunpack.c.1.s8 %v167
    %v196 = vunpack.c.0.s8 %v167
    %v197 = vpack.c.b16 %v195, %v196
    %v198 = vunpack.c.1.s8 %v168
    %v199 = vunpack.c.0.s8 %v168
    %v200 = vpack.c.b16 %v198, %v199
    %v201 = vunpack.c.1.s8 %v169
    %v202 = vunpack.c.0.s8 %v169
    %v203 = vpack.c.b16 %v201, %v202
    %v204 = vunpack.c.1.s8 %v170
    %v205 = vunpack.c.0.s8 %v170
    %v206 = vpack.c.b16 %v204, %v205
    %v207 = vunpack.c.1.s8 %v171
    %v208 = vunpack.c.0.s8 %v171
    %v209 = vpack.c.b16 %v207, %v208
    %v210 = vunpack.c.1.s8 %v172
    %v211 = vunpack.c.0.s8 %v172
    %v212 = vpack.c.b16 %v210, %v211
    %v213 = vunpack.c.1.s8 %v173
    %v214 = vunpack.c.0.s8 %v173
    %v215 = vpack.c.b16 %v213, %v214
    %v216 = vunpack.c.1.s8 %v174
    %v217 = vunpack.c.0.s8 %v174
    %v218 = vpack.c.b16 %v216, %v217
    %v219 = vunpack.c.1.s8 %v175
    %v220 = vunpack.c.0.s8 %v175
    %v221 = vpack.c.b16 %v219, %v220
    %v222 = vunpack.c.1.s8 %v176
    %v223 = vunpack.c.0.s8 %v176
    %v224 = vpack.c.b16 %v222, %v223
    %vm225 = vcmp.ne.s16.totalorder %v179, 0
    %vm226 = vcmp.ne.s16.totalorder %v182, 0
    %vm227 = vcmp.ne.s16.totalorder %v185, 0
    %vm228 = vcmp.ne.s16.totalorder %v188, 0
    %vm229 = vcmp.ne.s16.totalorder %v191, 0
    %vm230 = vcmp.ne.s16.totalorder %v194, 0
    %vm231 = vcmp.ne.s16.totalorder %v197, 0
    %vm232 = vcmp.ne.s16.totalorder %v200, 0
    %vm233 = vcmp.ne.s16.totalorder %v203, 0
    %vm234 = vcmp.ne.s16.totalorder %v206, 0
    %vm235 = vcmp.ne.s16.totalorder %v209, 0
    %vm236 = vcmp.ne.s16.totalorder %v212, 0
    %vm237 = vcmp.ne.s16.totalorder %v215, 0
    %vm238 = vcmp.ne.s16.totalorder %v218, 0
    %vm239 = vcmp.ne.s16.totalorder %v221, 0
    %vm240 = vcmp.ne.s16.totalorder %v224, 0
    %v241 = vsel %vm225, %v69, 0
    %v242 = vsel %vm226, %v70, 0
    %v243 = vsel %vm227, %v71, 0
    %v244 = vsel %vm228, %v72, 0
    %v245 = vsel %vm229, %v73, 0
    %v246 = vsel %vm230, %v74, 0
    %v247 = vsel %vm231, %v75, 0
    %v248 = vsel %vm232, %v76, 0
    %v249 = vsel %vm233, %v77, 0
    %v250 = vsel %vm234, %v78, 0
    %v251 = vsel %vm235, %v79, 0
    %v252 = vsel %vm236, %v80, 0
    %v253 = vsel %vm237, %v81, 0
    %v254 = vsel %vm238, %v82, 0
    %v255 = vsel %vm239, %v83, 0
    %v256 = vsel %vm240, %v84, 0
    %v257 = vld [vmem:[#allocation2] sm:$0xff]
    %v258 = vld [vmem:[#allocation2 + $0x8] sm:$0xff]
    %v259 = vld [vmem:[#allocation3] sm:$0xf]
    %v260 = vld [vmem:[#allocation3 + $0x4] sm:$0xf]
    %v263 = vunpack.c.l.b16 %v259
    %v264 = vunpack.c.l.b16 %v260
    %v265 = vpack.c.b16 %v264, %v263
    %v283 = vunpack.c.l.b16 %v241
    %v284 = vunpack.c.l.b16 %v242
    %v285 = vunpack.c.l.b16 %v243
    %v286 = vunpack.c.l.b16 %v244
    %v287 = vunpack.c.l.b16 %v245
    %v288 = vunpack.c.l.b16 %v246
    %v289 = vunpack.c.l.b16 %v247
    %v290 = vunpack.c.l.b16 %v248
    %v291 = vunpack.c.l.b16 %v249
    %v292 = vunpack.c.l.b16 %v250
    %v293 = vunpack.c.l.b16 %v251
    %v294 = vunpack.c.l.b16 %v252
    %v295 = vunpack.c.l.b16 %v253
    %v296 = vunpack.c.l.b16 %v254
    %v297 = vunpack.c.l.b16 %v255
    %v298 = vunpack.c.l.b16 %v256
    %v299 = vpack.c.b16 %v284, %v283
    %v300 = vpack.c.b16 %v286, %v285
    %v301 = vpack.c.b16 %v288, %v287
    %v302 = vpack.c.b16 %v290, %v289
    %v303 = vpack.c.b16 %v292, %v291
    %v304 = vpack.c.b16 %v294, %v293
    %v305 = vpack.c.b16 %v296, %v295
    %v306 = vpack.c.b16 %v298, %v297
    %315 = vmatprep.subr.bf16.mxu0 0
    %316 = vmatpush1.bf16.xpose.msra.mxu0 %v306
    %317 = vmatprep.subr.bf16.mxu0 0
    %318 = vmatpush1.bf16.xpose.msra.mxu0 %v305
    %319 = vmatprep.subr.bf16.mxu0 0
    %320 = vmatpush1.bf16.xpose.msra.mxu0 %v304
    %321 = vmatprep.subr.bf16.mxu0 0
    %322 = vmatpush1.bf16.xpose.msra.mxu0 %v303
    %323 = vmatprep.subr.bf16.mxu0 0
    %324 = vmatpush1.bf16.xpose.msra.mxu0 %v302
    %325 = vmatprep.subr.bf16.mxu0 0
    %326 = vmatpush1.bf16.xpose.msra.mxu0 %v301
    %327 = vmatprep.subr.bf16.mxu0 0
    %328 = vmatpush1.bf16.xpose.msra.mxu0 %v300
    %329 = vmatprep.subr.bf16.mxu0 0
    %330 = vmatpush1.bf16.xpose.msra.mxu0 %v299
    %331 = vmatprep.subr.bf16.mxu0 0
    %332 = vmatpush2.bf16.xpose.msra.mxu0 0
    %333 = vmatprep.subr.bf16.mxu0 0
    %334 = vmatpush2.bf16.xpose.msra.mxu0 0
    %335 = vmatprep.subr.bf16.mxu0 0
    %336 = vmatpush2.bf16.xpose.msra.mxu0 0
    %337 = vmatprep.subr.bf16.mxu0 0
    %338 = vmatpush2.bf16.xpose.msra.mxu0 0
    %339 = vmatprep.subr.bf16.mxu0 0
    %340 = vmatpush2.bf16.xpose.msra.mxu0 0
    %341 = vmatprep.subr.bf16.mxu0 0
    %342 = vmatpush2.bf16.xpose.msra.mxu0 0
    %343 = vmatprep.subr.bf16.mxu0 0
    %344 = vmatpush2.bf16.xpose.msra.mxu0 0
    %345 = vmatprep.subr.bf16.mxu0 0
    %346 = vmatpush2.bf16.xpose.msra.mxu0 0
    %347 = vmatprep.mubr.bf16.mxu0 0
    %348 = vmatmul.mubr.bf16.gmra.mxu0 %v265
    %v349 = vpop.f32.mrf.mxu0
    %v350 = vadd.f32 0.0, %v349
    %v351 = vpop.f32.mrf.mxu0
    %v352 = vpop.f32.mrf.mxu0
    %v353 = vadd.f32 0.0, %v352
    %v354 = vpop.f32.mrf.mxu0
    %355 = vdwg.mxu0
    %v356 = vadd.f32 %v257, %v350
    %v357 = vadd.f32 %v258, %v353
    %358 = vst [vmem:[#allocation2] sm:$0xff] %v356
    %359 = vst [vmem:[#allocation2 + $0x8] sm:$0xff] %v357
    // Predicated region
    $region34: #{tpu_custom_call.1} parent=1 // pred_check
      %p360 = pneg %p63
    $region35: #{tpu_custom_call.1} parent=1 // pred_check_branch
      %362 = sbr.rel (%p360) target = $region37
    $region36: #{tpu_custom_call.1} parent=1 // pred_region
      %v363 = vld [vmem:[#allocation2] sm:$0xff]
      %v364 = vld [vmem:[#allocation2 + $0x8] sm:$0xff]
      %v365 = vld [vmem:[%s3] sm:$0x1]
      %v367 = vlaneseq
      %v368 = vshrl.u32 %v367, 7
      %v369 = vsub.s32 0, %v368
      %v370 = vrot.slane %v365, %v369
      %v372 = vadd.f32 %v363, %v370
      %v373 = vadd.f32 %v364, %v370
      %374 = vst [vmem:[#allocation9] sm:$0xff] %v372
      %375 = vst [vmem:[#allocation9 + $0x8] sm:$0xff] %v373
    $region37: #{tpu_custom_call.1} parent=1 // pred_fallthru
      _
    // Predicated region
    $region38: #{tpu_custom_call.1} parent=1 // pred_check
      _
    $region39: #{tpu_custom_call.1} parent=1 // pred_check_branch
      %377 = sbr.rel (0) target = $region41
    $region40: #{tpu_custom_call.1} parent=1 // pred_region
      %s379 = ssub.s32 256, 256
      %380 = vsyncadd [#allocation5], %s379
      %s381 = sshll.u32 [#allocation9], 4
      %s382 = int_to_ptr.vmem [resolvable:$true] %s381
      %387 = dma.vmem_to_hbm [thread:$0]  %s382, 256, %s4, [#allocation5], 128, 128, 8
    $region41: #{tpu_custom_call.1} parent=1 // pred_fallthru
      _
    // Predicated region
    $region42: #{tpu_custom_call.1} parent=1 // pred_check
      _
    $region43: #{tpu_custom_call.1} parent=1 // pred_check_branch
      %389 = sbr.rel (0) target = $region45
    $region44: #{tpu_custom_call.1} parent=1 // pred_region
      %390 = dma.done [#allocation5], 256
    $region45: #{tpu_custom_call.1} parent=1 // pred_fallthru
      _
    %391 = vsyncpa [#allocation4], 1
    %392 = vsyncpa [#allocation7], 1
    %393 = vsyncpa [#allocation5], 1

</llo_original>
